<compile_context>
chip_gen: v7x
topology: tpu7x:2x2x1
jax: 0.10.0
libtpu: 0.0.40
codegen_flags: <defaults>
</compile_context>

<pallas_src>
import functools

import jax
import jax.numpy as jnp
import numpy as np
from jax import lax
from jax.experimental import pallas as pl
from jax.experimental.pallas import tpu as pltpu


def _round_up(x, m):
    return ((x + m - 1) // m) * m


def _pick_block_rows(n, d, itemsize):
    """Rows per grid step: multiple of 8 (f32) / 16 (bf16) for sublane packing,
    capped so one (R, D) target buffer is <= ~4 MiB (x2 double-buffer <= 8 MiB,
    safe for v5e/v6e default scoped VMEM and v7x's 64 MiB physical VMEM)."""
    mult = max(8, 32 // max(1, itemsize))
    budget = 4 << 20
    by_vmem = max(mult, budget // max(1, d * itemsize))
    r = min(1024, by_vmem, _round_up(n, mult))
    return max(mult, (r // mult) * mult)


def _grouped_row_mse_kernel(gid_ref, preds_ref, tgt_ref, o_ref, *, d_true, batch):
    # gid_ref: (R, 1) int32, preds_ref: (B, D), tgt_ref: (R, D), o_ref: (R, 1) f32
    r = tgt_ref.shape[0]
    onehot = (gid_ref[...] ==
              lax.broadcasted_iota(jnp.int32, (r, batch), 1)).astype(jnp.float32)
    # In-kernel gather of the per-row pred via a tiny MXU matmul (replaces
    # torch.repeat_interleave without materializing it or re-DMA'ing preds).
    gathered = jnp.dot(onehot, preds_ref[...].astype(jnp.float32),
                       preferred_element_type=jnp.float32)
    diff = gathered - tgt_ref[...].astype(jnp.float32)
    o_ref[...] = jnp.sum(diff * diff, axis=-1, keepdims=True) * jnp.float32(1.0 / d_true)


def _paired_row_mse_kernel(pred_ref, tgt_ref, o_ref, *, d_true):
    # pred_ref / tgt_ref: (R, D), o_ref: (R, 1) f32  (empty-lengthes branch)
    diff = pred_ref[...].astype(jnp.float32) - tgt_ref[...].astype(jnp.float32)
    o_ref[...] = jnp.sum(diff * diff, axis=-1, keepdims=True) * jnp.float32(1.0 / d_true)


def _per_row_mse_grouped(gid, preds2, targets2):
    """Per-target-row MSE vs. the gathered pred row.

    gid: (N,) int32 row->group map; preds2: (B, D); targets2: (N, D).
    Returns (N,) float32.
    """
    n, d = targets2.shape
    b = preds2.shape[0]
    isz = targets2.dtype.itemsize
    r = _pick_block_rows(n, d, isz)
    nblk = pl.cdiv(n, r)
    kernel = functools.partial(_grouped_row_mse_kernel, d_true=d, batch=b)
    cost = pl.CostEstimate(
        flops=int(n) * (3 * d + 2 * b * d),
        transcendentals=0,
        bytes_accessed=int(n * d * isz + b * d * preds2.dtype.itemsize + 8 * n),
    )
    out = pl.pallas_call(
        kernel,
        out_shape=jax.ShapeDtypeStruct((nblk * r, 1), jnp.float32),
        grid=(nblk,),
        in_specs=[
            pl.BlockSpec((r, 1), lambda i: (i, 0)),   # gid tile
            pl.BlockSpec((b, d), lambda i: (0, 0)),   # preds, resident (DMA'd once)
            pl.BlockSpec((r, d), lambda i: (i, 0)),   # target tile
        ],
        out_specs=pl.BlockSpec((r, 1), lambda i: (i, 0)),
        compiler_params=pltpu.CompilerParams(
            dimension_semantics=("parallel",),        # rows independent -> dual-TC v7x
            vmem_limit_bytes=32 << 20,
        ),
        cost_estimate=cost,
    )(gid.reshape(n, 1), preds2, targets2)
    return out.reshape(-1)[:n]


def _per_row_mse_paired(preds2, targets2):
    """Per-row MSE when preds and targets have identical row counts."""
    n, d = targets2.shape
    isz = targets2.dtype.itemsize
    r = _pick_block_rows(n, d, isz)
    nblk = pl.cdiv(n, r)
    kernel = functools.partial(_paired_row_mse_kernel, d_true=d)
    cost = pl.CostEstimate(
        flops=3 * int(n) * d,
        transcendentals=0,
        bytes_accessed=int(n * d * (isz + preds2.dtype.itemsize) + 4 * n),
    )
    out = pl.pallas_call(
        kernel,
        out_shape=jax.ShapeDtypeStruct((nblk * r, 1), jnp.float32),
        grid=(nblk,),
        in_specs=[
            pl.BlockSpec((r, d), lambda i: (i, 0)),
            pl.BlockSpec((r, d), lambda i: (i, 0)),
        ],
        out_specs=pl.BlockSpec((r, 1), lambda i: (i, 0)),
        compiler_params=pltpu.CompilerParams(
            dimension_semantics=("parallel",),
            vmem_limit_bytes=32 << 20,
        ),
        cost_estimate=cost,
    )(preds2, targets2)
    return out.reshape(-1)[:n]


def thre_mse_loss_pallas(preds, targets, lengthes, threshold):
    """preds: (B, T, H); targets: (N, T, H); lengthes: list of python ints (or empty);
    threshold: python float or None."""
    batch = preds.shape[0]
    # Collapsing the trailing contiguous dims is a bitcast -- no HBM copy,
    # no lane padding (block last dim == full array dim is allowed).
    d = int(np.prod(preds.shape[1:]))
    preds2 = preds.reshape(batch, d)
    targets2 = targets.reshape(targets.shape[0], d)

    if not lengthes:
        assert targets.shape[0] == batch
        all_mse = _per_row_mse_paired(preds2, targets2)
        if threshold is not None:
            keep = (jnp.abs(all_mse) >= threshold).astype(all_mse.dtype)
            all_mse = all_mse * keep
        return jnp.mean(all_mse)

    assert sum(lengthes) == targets.shape[0], "sum(lengthes) must equal targets rows"
    assert all(l > 0 for l in lengthes), "zero-length groups are not supported"
    n = targets.shape[0]
    # row -> group map (replaces torch.repeat_interleave; never materialized)
    gid = jnp.asarray(np.repeat(np.arange(batch, dtype=np.int32), lengthes))
    all_mse = _per_row_mse_grouped(gid, preds2, targets2)

    # Vectorized per-group min + threshold gating (replaces the Python loop).
    group_min = jax.ops.segment_min(all_mse, gid, num_segments=batch,
                                    indices_are_sorted=True)
    if threshold is None:
        return jnp.sum(group_min) / jnp.float32(batch)
    gated = jnp.where(group_min > threshold, group_min, jnp.float32(0.0))
    return jnp.sum(gated) / jnp.float32(batch)


def thre_mse_loss_ref(preds, targets, lengthes, threshold):
    """Pure-JAX reference mirroring the torch module exactly."""
    batch = preds.shape[0]
    p = preds.astype(jnp.float32)
    t = targets.astype(jnp.float32)
    if not lengthes:
        all_mse = jnp.mean((p - t) ** 2, axis=(1, 2))
        if threshold is not None:
            keep = (jnp.abs(all_mse) >= threshold).astype(all_mse.dtype)
            all_mse = all_mse * keep
        return jnp.mean(all_mse)
    idx = jnp.asarray(np.repeat(np.arange(batch, dtype=np.int32), lengthes))
    all_mse = jnp.mean((p[idx] - t) ** 2, axis=(1, 2))
    results = jnp.float32(0.0)
    start = 0
    for length in lengthes:
        cur = jnp.min(all_mse[start:start + length])
        if threshold is None:
            results = results + cur
        else:
            results = results + jnp.where(cur > threshold, cur, jnp.float32(0.0))
        start += length
    return results / jnp.float32(batch)


if __name__ == "__main__":
    key = jax.random.PRNGKey(0)
    B, T, H = 4, 8, 20                 # batch, seq, hidden -> D = 160 (no padding needed)
    lengthes = [3, 2, 4, 3]            # candidates per pred, sum = 12
    N = sum(lengthes)
    kp, kt, kb = jax.random.split(key, 3)
    preds = jax.random.normal(kp, (B, T, H), dtype=jnp.float32)
    targets = jax.random.normal(kt, (N, T, H), dtype=jnp.float32)

    # grouped branch, with threshold
    out = jax.block_until_ready(thre_mse_loss_pallas(preds, targets, lengthes, 0.5))
    ref = jax.block_until_ready(thre_mse_loss_ref(preds, targets, lengthes, 0.5))
    assert jnp.allclose(out, ref, rtol=1e-4, atol=1e-6), (out, ref)

    # grouped branch, threshold=None
    out_n = jax.block_until_ready(thre_mse_loss_pallas(preds, targets, lengthes, None))
    ref_n = jax.block_until_ready(thre_mse_loss_ref(preds, targets, lengthes, None))
    assert jnp.allclose(out_n, ref_n, rtol=1e-4, atol=1e-6), (out_n, ref_n)

    # empty-lengthes branch (preds/targets same shape), with threshold
    targets_b = jax.random.normal(kb, (B, T, H), dtype=jnp.float32)
    out_e = jax.block_until_ready(thre_mse_loss_pallas(preds, targets_b, [], 1.0))
    ref_e = jax.block_until_ready(thre_mse_loss_ref(preds, targets_b, [], 1.0))
    assert jnp.allclose(out_e, ref_e, rtol=1e-4, atol=1e-6), (out_e, ref_e)

    # empty-lengthes branch, threshold=None
    out_e2 = jax.block_until_ready(thre_mse_loss_pallas(preds, targets_b, [], None))
    ref_e2 = jax.block_until_ready(thre_mse_loss_ref(preds, targets_b, [], None))
    assert jnp.allclose(out_e2, ref_e2, rtol=1e-4, atol=1e-6), (out_e2, ref_e2)

    print("KERNEL_OK")
</pallas_src>

<mosaic_0001>
module attributes {stable_mosaic.version = 11 : i64} {
  func.func @_grouped_row_mse_kernel(%arg0: i32, %arg1: memref<16x1xi32, #tpu.memory_space<vmem>>, %arg2: memref<4x160xf32, #tpu.memory_space<vmem>>, %arg3: memref<16x160xf32, #tpu.memory_space<vmem>>, %arg4: memref<16x1xf32, #tpu.memory_space<vmem>>) attributes {dimension_semantics = [#tpu.dimension_semantics<parallel>], iteration_bounds = array<i64: 1>, scalar_prefetch = 0 : i64, scratch_operands = 0 : i64, tpu.core_type = #tpu.core_type<tc>, window_params = [{transform_indices = @transform_0, window_bounds = array<i64: 16, 1>}, {pipeline_mode = #tpu.pipeline_mode<synchronous>, transform_indices = @transform_1, window_bounds = array<i64: 4, 160>}, {transform_indices = @transform_2, window_bounds = array<i64: 16, 160>}, {transform_indices = @transform_3, window_bounds = array<i64: 16, 1>}]} {
    %c0 = arith.constant 0 : index
    %c0_0 = arith.constant 0 : index
    %0 = vector.load %arg1[%c0, %c0_0] : memref<16x1xi32, #tpu.memory_space<vmem>>, vector<16x1xi32>
    %1 = tpu.iota {dimensions = array<i32: 1>} : vector<16x4xi32>
    %2 = vector.broadcast %0 : vector<16x1xi32> to vector<16x4xi32>
    %3 = arith.cmpi eq, %2, %1 : vector<16x4xi32>
    %4 = arith.extui %3 : vector<16x4xi1> to vector<16x4xi32>
    %5 = arith.sitofp %4 : vector<16x4xi32> to vector<16x4xf32>
    %c0_1 = arith.constant 0 : index
    %c0_2 = arith.constant 0 : index
    %6 = vector.load %arg2[%c0_1, %c0_2] : memref<4x160xf32, #tpu.memory_space<vmem>>, vector<4x160xf32>
    %cst = arith.constant dense<0.000000e+00> : vector<16x160xf32>
    %7 = tpu.matmul %5, %6, %cst {dimension_numbers = #tpu.dot_dimension_numbers<[1], [0], [0], [1], [0, 0, 1, 1], [], []>} : vector<16x4xf32>, vector<4x160xf32>, vector<16x160xf32> -> vector<16x160xf32>
    %c0_3 = arith.constant 0 : index
    %c0_4 = arith.constant 0 : index
    %8 = vector.load %arg3[%c0_3, %c0_4] : memref<16x160xf32, #tpu.memory_space<vmem>>, vector<16x160xf32>
    %9 = arith.subf %7, %8 : vector<16x160xf32>
    %10 = arith.mulf %9, %9 : vector<16x160xf32>
    %cst_5 = arith.constant dense<0.000000e+00> : vector<16xf32>
    %11 = vector.multi_reduction <add>, %10, %cst_5 [1] : vector<16x160xf32> to vector<16xf32>
    %12 = vector.shape_cast %11 : vector<16xf32> to vector<16x1xf32>
    %cst_6 = arith.constant 6.250000e-03 : f32
    %13 = vector.broadcast %cst_6 : f32 to vector<16x1xf32>
    %14 = arith.mulf %12, %13 : vector<16x1xf32>
    %c0_7 = arith.constant 0 : index
    %c0_8 = arith.constant 0 : index
    %15 = vector.load %arg4[%c0_7, %c0_8] : memref<16x1xf32, #tpu.memory_space<vmem>>, vector<16x1xf32>
    tpu.vector_store %arg4[%c0_7, %c0_8], %14 {strides = array<i32>} : memref<16x1xf32, #tpu.memory_space<vmem>>, vector<16x1xf32>,
    return
  }
  func.func @transform_0(%arg0: i32) -> (i32, i32) {
    %c0_i32 = arith.constant 0 : i32
    %c0_i32_0 = arith.constant 0 : i32
    return %arg0, %c0_i32 : i32, i32
  }
  func.func @transform_1(%arg0: i32) -> (i32, i32) {
    %c0_i32 = arith.constant 0 : i32
    %c0_i32_0 = arith.constant 0 : i32
    %c0_i32_1 = arith.constant 0 : i32
    return %c0_i32, %c0_i32_0 : i32, i32
  }
  func.func @transform_2(%arg0: i32) -> (i32, i32) {
    %c0_i32 = arith.constant 0 : i32
    %c0_i32_0 = arith.constant 0 : i32
    return %arg0, %c0_i32 : i32, i32
  }
  func.func @transform_3(%arg0: i32) -> (i32, i32) {
    %c0_i32 = arith.constant 0 : i32
    %c0_i32_0 = arith.constant 0 : i32
    return %arg0, %c0_i32 : i32, i32
  }
}

</mosaic_0001>

<llo_original>
// kernel: tpu_custom_call.1
$region0: #{tpu_custom_call.1}
  #allocation0 [shape = 'u32[]', space=smem, size = 0x4, offset = 0x4, fixed_abs, tag = 'smem constant byte address 0x4 - core index']
  #allocation1 [shape = 'u32[144,128]{1,0:T(1,128)}', space=vmem, size = 0x12000, scoped, tag = 'internal scratch']
  %s0 = inlined_call_operand.vmem [shape: s32[12,1], index: 0, kind: input, shape index: {}]
  %s1 = inlined_call_operand.vmem [shape: f32[4,160], index: 1, kind: input, shape index: {}]
  %s2 = inlined_call_operand.hbm [shape: f32[12,160], index: 2, kind: input, shape index: {}]
  %s3 = inlined_call_operand.vmem [shape: f32[16,1], index: 3, kind: output, shape index: {}]
  %s4 = sld [smem:[#allocation0]]
  $region26: #{tpu_custom_call.1} parent=0
    _
  %s6 = ssub.s32 1, %s4
  %s7 = scalar_select 0, %s6, %s4
  $region1: #{tpu_custom_call.1} parent=0
    #allocation2 [shape = 'u8[16384]{0}', space=vmem, size = 0x4000, scoped, tag = 'input window, operand 2, single buffered']
    #allocation3 [shape = 's32[1]{0}', space=sflag, size = 0x4, scoped, tag = 'scoped memory for tpu_custom_call.1']
    %8 = vsyncpa [#allocation3], 0
    // Predicated region
    $region2: #{tpu_custom_call.1} parent=1 // pred_check
      _
    $region3: #{tpu_custom_call.1} parent=1 // pred_check_branch
      %10 = sbr.rel (0) target = $region5
    $region4: #{tpu_custom_call.1} parent=1 // pred_region
      _
    $region5: #{tpu_custom_call.1} parent=1 // pred_fallthru
      _
    // Predicated region
    $region6: #{tpu_custom_call.1} parent=1 // pred_check
      _
    $region7: #{tpu_custom_call.1} parent=1 // pred_check_branch
      %12 = sbr.rel (0) target = $region9
    $region8: #{tpu_custom_call.1} parent=1 // pred_region
      _
    $region9: #{tpu_custom_call.1} parent=1 // pred_fallthru
      _
    // Predicated region
    $region10: #{tpu_custom_call.1} parent=1 // pred_check
      _
    $region11: #{tpu_custom_call.1} parent=1 // pred_check_branch
      %14 = sbr.rel (0) target = $region13
    $region12: #{tpu_custom_call.1} parent=1 // pred_region
      %s16 = ssub.s32 512, 512
      %17 = vsyncadd [#allocation3], %s16
      %s18 = sshll.u32 [#allocation2], 4
      %s19 = int_to_ptr.vmem [resolvable:$true] %s18
      %24 = dma.hbm_to_vmem [thread:$0]  %s2, 512, %s19, [#allocation3], 256, 256, 16
    $region13: #{tpu_custom_call.1} parent=1 // pred_fallthru
      _
    // Predicated region
    $region14: #{tpu_custom_call.1} parent=1 // pred_check
      _
    $region15: #{tpu_custom_call.1} parent=1 // pred_check_branch
      %26 = sbr.rel (0) target = $region17
    $region16: #{tpu_custom_call.1} parent=1 // pred_region
      %27 = dma.done [#allocation3], 512
    $region17: #{tpu_custom_call.1} parent=1 // pred_fallthru
      _
    %v28 = vld [vmem:[%s0] sm:$0xff]
    %v29 = vld [vmem:[%s0 + $0x8] sm:$0xff]
    %v30 = vlaneseq
    %v31 = vand.u32 %v30, 127
    %32 = vset.pattern.permute.xlu0 0
    %33 = vperm.xlu0 %32, %v28
    %v34 = vpop.permute.xlu0 %33
    %35 = vset.pattern.permute.xlu0 0
    %36 = vperm.xlu0 %35, %v29
    %v37 = vpop.permute.xlu0 %36
    %vm38 = vcmp.eq.s32.totalorder %v34, %v31
    %vm39 = vcmp.eq.s32.totalorder %v37, %v31
    %v40 = vsel %vm38, 1, 0
    %v41 = vsel %vm39, 1, 0
    %v42 = vcvt.s32.f32 %v40
    %v43 = vcvt.s32.f32 %v41
    %v44 = vld [vmem:[%s1] sm:$0xff]
    %v46 = vcombine.high %v44, %v44
    %vm47 = vcmask 31744
    %v49 = vsel %vm47, %v42, 0
    %v52 = vsel %vm47, %v43, 0
    %vm54 = vcmask 1043456
    %v55 = vsel %vm54, %v44, 0
    %v57 = vsel %vm54, %v46, 0
    %59 = vmatprep.subr.mxu0 %v57
    %60 = vmatpush1.msra.mxu0 %v55
    %61 = vmatprep.subr.mxu0 0.0
    %62 = vmatpush1.msra.mxu0 0.0
    %63 = vmatprep.subr.mxu0 0.0
    %64 = vmatpush1.msra.mxu0 0.0
    %65 = vmatprep.subr.mxu0 0.0
    %66 = vmatpush1.msra.mxu0 0.0
    %67 = vmatprep.subr.mxu0 0.0
    %68 = vmatpush1.msra.mxu0 0.0
    %69 = vmatprep.subr.mxu0 0.0
    %70 = vmatpush1.msra.mxu0 0.0
    %71 = vmatprep.subr.mxu0 0.0
    %72 = vmatpush1.msra.mxu0 0.0
    %73 = vmatprep.subr.mxu0 0.0
    %74 = vmatpush1.msra.mxu0 0.0
    %75 = vmatprep.subr.mxu0 0.0
    %76 = vmatpush1.msra.mxu0 0.0
    %77 = vmatprep.subr.mxu0 0.0
    %78 = vmatpush1.msra.mxu0 0.0
    %79 = vmatprep.subr.mxu0 0.0
    %80 = vmatpush1.msra.mxu0 0.0
    %81 = vmatprep.subr.mxu0 0.0
    %82 = vmatpush1.msra.mxu0 0.0
    %83 = vmatprep.subr.mxu0 0.0
    %84 = vmatpush1.msra.mxu0 0.0
    %85 = vmatprep.subr.mxu0 0.0
    %86 = vmatpush1.msra.mxu0 0.0
    %87 = vmatprep.subr.mxu0 0.0
    %88 = vmatpush1.msra.mxu0 0.0
    %89 = vmatprep.subr.mxu0 0.0
    %90 = vmatpush1.msra.mxu0 0.0
    %91 = vmatprep.subr.mxu0 0.0
    %92 = vmatpush1.msra.mxu0 0.0
    %93 = vmatprep.subr.mxu0 0.0
    %94 = vmatpush1.msra.mxu0 0.0
    %95 = vmatprep.subr.mxu0 0.0
    %96 = vmatpush1.msra.mxu0 0.0
    %97 = vmatprep.subr.mxu0 0.0
    %98 = vmatpush1.msra.mxu0 0.0
    %99 = vmatprep.subr.mxu0 0.0
    %100 = vmatpush1.msra.mxu0 0.0
    %101 = vmatprep.subr.mxu0 0.0
    %102 = vmatpush1.msra.mxu0 0.0
    %103 = vmatprep.subr.mxu0 0.0
    %104 = vmatpush1.msra.mxu0 0.0
    %105 = vmatprep.subr.mxu0 0.0
    %106 = vmatpush1.msra.mxu0 0.0
    %107 = vmatprep.subr.mxu0 0.0
    %108 = vmatpush1.msra.mxu0 0.0
    %109 = vmatprep.subr.mxu0 0.0
    %110 = vmatpush1.msra.mxu0 0.0
    %111 = vmatprep.subr.mxu0 0.0
    %112 = vmatpush1.msra.mxu0 0.0
    %113 = vmatprep.subr.mxu0 0.0
    %114 = vmatpush1.msra.mxu0 0.0
    %115 = vmatprep.subr.mxu0 0.0
    %116 = vmatpush1.msra.mxu0 0.0
    %117 = vmatprep.subr.mxu0 0.0
    %118 = vmatpush1.msra.mxu0 0.0
    %119 = vmatprep.subr.mxu0 0.0
    %120 = vmatpush1.msra.mxu0 0.0
    %121 = vmatprep.subr.mxu0 0.0
    %122 = vmatpush1.msra.mxu0 0.0
    %123 = vmatprep.mubr.f32.mxu0 0.0
    %124 = vmatmul.mubr.f32.gmra.mrb[0].mxu0 %v49
    %v125 = vpop.f32.mrb[0].mxu0
    %v126 = vadd.f32 0.0, %v125
    %v127 = vpop.f32.mrb[0].mxu0
    %v128 = vadd.f32 0.0, %v127
    %129 = vmatprep.mubr.f32.mxu0 0.0
    %130 = vmatmul.mubr.f32.gmra.mrb[0].mxu0 %v52
    %v131 = vpop.f32.mrb[0].mxu0
    %v132 = vadd.f32 0.0, %v131
    %v133 = vpop.f32.mrb[0].mxu0
    %v134 = vadd.f32 0.0, %v133
    %135 = vdwg.mxu0
    %v136 = vld [vmem:[#allocation2] sm:$0xff]
    %v137 = vld [vmem:[#allocation2 + $0x8] sm:$0xff]
    %v138 = vld [vmem:[#allocation2 + $0x10] sm:$0xff]
    %v139 = vld [vmem:[#allocation2 + $0x18] sm:$0xff]
    %v140 = vsub.f32 %v126, %v136
    %v141 = vsub.f32 %v128, %v137
    %v142 = vsub.f32 %v132, %v138
    %v143 = vsub.f32 %v134, %v139
    %v144 = vmul.f32 %v140, %v140
    %v145 = vmul.f32 %v141, %v141
    %v146 = vmul.f32 %v142, %v142
    %v147 = vmul.f32 %v143, %v143
    %vm148 = vcmask 261120
    %v149 = vsel %vm148, %v145, 0.0
    %v150 = vadd.f32 %v144, %v149
    %151 = vadd.xlane.f32.xlu0 %v150
    %v152 = vpop.xlane.xlu0 %151
    %v153 = vsel %vm148, %v147, 0.0
    %v154 = vadd.f32 %v146, %v153
    %155 = vadd.xlane.f32.xlu0 %v154
    %v156 = vpop.xlane.xlu0 %155
    %v157 = vmul.f32 %v152, 0.00625
    %v158 = vmul.f32 %v156, 0.00625
    %vm159 = vcmask 7168
    %160 = vst.msk [vmem:[%s3] sm:$0xff] %vm159, %v157
    %161 = vst.msk [vmem:[%s3 + $0x8] sm:$0xff] %vm159, %v158
    // Predicated region
    $region18: #{tpu_custom_call.1} parent=1 // pred_check
      _
    $region19: #{tpu_custom_call.1} parent=1 // pred_check_branch
      %163 = sbr.rel (0) target = $region21
    $region20: #{tpu_custom_call.1} parent=1 // pred_region
      _
    $region21: #{tpu_custom_call.1} parent=1 // pred_fallthru
      _
    // Predicated region
    $region22: #{tpu_custom_call.1} parent=1 // pred_check
      _
    $region23: #{tpu_custom_call.1} parent=1 // pred_check_branch
      %165 = sbr.rel (0) target = $region25
    $region24: #{tpu_custom_call.1} parent=1 // pred_region
      _
    $region25: #{tpu_custom_call.1} parent=1 // pred_fallthru
      _
    %166 = vsyncpa [#allocation3], 1

</llo_original>
